<compile_context>
chip_gen: v7x
topology: tpu7x:2x2x1
jax: 0.10.0
libtpu: 0.0.40
codegen_flags: <defaults>
</compile_context>

<pallas_src>
import functools

import jax
import jax.numpy as jnp
from jax.experimental import pallas as pl
from jax.experimental.pallas import tpu as pltpu


_EPS = 1e-6

# Row layout of the packed per-gene parameter slab (precomputed in the wrapper).
_ROW_TON = 0      # exp(ton)
_ROW_TOFF = 1     # exp(toff)
_ROW_BETA = 2     # exp(beta)
_ROW_GAMMA = 3    # exp(gamma)
_ROW_AB = 4       # alpha / beta
_ROW_AG = 5       # alpha / gamma
_ROW_C1 = 6       # alpha / (gamma - beta + eps) * (1 - unstab)
_ROW_C2 = 7       # alpha * unstab
_ROW_U0 = 8       # u at switching time toff
_ROW_S0 = 9       # s at switching time toff
_ROW_D1 = 10      # -beta * u0_ / (gamma - beta + eps) * (1 - unstab)
_ROW_D2 = 11      # -beta * u0_ * unstab
_ROW_SC = 12      # exp(scaling)
_NROWS = 16       # padded to a multiple of 8 sublanes


def _decoder_fwd_kernel(t_ref, p_ref, uhat_ref, shat_ref, *, neg_slope):
    """t tile: (tn, 1); packed per-gene params: (16, tg); outputs: (tn, tg)."""
    tn, tg = uhat_ref.shape
    one = jnp.float32(1.0)

    p = p_ref[...]                                   # (16, tg)
    ton = p[_ROW_TON:_ROW_TON + 1, :]
    toff = p[_ROW_TOFF:_ROW_TOFF + 1, :]
    b = p[_ROW_BETA:_ROW_BETA + 1, :]
    g = p[_ROW_GAMMA:_ROW_GAMMA + 1, :]
    ab = p[_ROW_AB:_ROW_AB + 1, :]
    ag = p[_ROW_AG:_ROW_AG + 1, :]
    c1 = p[_ROW_C1:_ROW_C1 + 1, :]
    c2 = p[_ROW_C2:_ROW_C2 + 1, :]
    u0_ = p[_ROW_U0:_ROW_U0 + 1, :]
    s0_ = p[_ROW_S0:_ROW_S0 + 1, :]
    d1 = p[_ROW_D1:_ROW_D1 + 1, :]
    d2 = p[_ROW_D2:_ROW_D2 + 1, :]
    sc = p[_ROW_SC:_ROW_SC + 1, :]

    # Hoist the (tn,1) -> (tn,tg) lane broadcast of t (used by o and tau below).
    tb = jnp.broadcast_to(t_ref[...], (tn, tg))

    if neg_slope == 0.0:
        def leaky(x):
            return jnp.maximum(x, 0.0)
    else:
        ns = jnp.float32(neg_slope)

        def leaky(x):
            return jnp.where(x >= 0.0, x, ns * x)

    # Boolean switching mask (matches torch: o = (t <= toff)).
    o = tb <= toff

    # Single-branch evaluation: the element only ever needs ONE of the two
    # branches, so select tau first and evaluate the (shared-form) solution once.
    tau = leaky(jnp.where(o, tb - ton, tb - toff))
    expb = jnp.exp(-b * tau)                         # 2 exps/elem total
    expg = jnp.exp(-g * tau)

    # induction (o): u = ab*(1-expb);  s = ag*(1-expg) + c1*(expg-expb) + c2*tau*expg
    # repression  : u = u0_*expb;      s = s0_*expg    + d1*(expg-expb) + d2*tau*expg
    u = jnp.where(o, ab * (one - expb), u0_ * expb)
    s = (jnp.where(o, ag * (one - expg), s0_ * expg)
         + jnp.where(o, c1, d1) * (expg - expb)
         + jnp.where(o, c2, d2) * (tau * expg))

    uhat_ref[...] = jnp.maximum(u * sc, 0.0).astype(uhat_ref.dtype)
    shat_ref[...] = jnp.maximum(s, 0.0).astype(shat_ref.dtype)


def _round_up(x, m):
    return ((x + m - 1) // m) * m


def _device_kind():
    try:
        return jax.devices()[0].device_kind.lower()
    except Exception:  # pragma: no cover - defensive, keeps CPU/interpret paths alive
        return ""


def decoder_forward(t, alpha, beta, gamma, ton, toff, scaling,
                    neg_slope=0.0, *, tn=None, vmem_limit_bytes=None,
                    out_dtype=jnp.float32):
    """Pallas Decoder.forward.

    t: (N, 1) or (N,) float32 cell times.
    alpha..scaling: (G,) float32 log-scale parameters (as stored in the module).
    Returns (Uhat, Shat), each (N, G) of dtype `out_dtype` (default float32).
    """
    t = jnp.asarray(t, jnp.float32).reshape(-1, 1)
    N = t.shape[0]
    G = alpha.shape[0]
    Gp = _round_up(G, 128)

    # ---- per-gene precompute (O(G) XLA work, hoisted out of the N x G kernel) ----
    def pad_g(v):
        v = jnp.asarray(v, jnp.float32)
        return jnp.pad(v, (0, Gp - G))

    la, lb, lg = pad_g(alpha), pad_g(beta), pad_g(gamma)
    lton, ltoff, lsc = pad_g(ton), pad_g(toff), pad_g(scaling)

    a = jnp.exp(la)
    b = jnp.exp(lb)
    g = jnp.exp(lg)
    ton_e = jnp.exp(lton)
    toff_e = jnp.exp(ltoff)
    sc = jnp.exp(lsc)

    unstab = (jnp.abs(b - g) < _EPS).astype(jnp.float32)
    stab = 1.0 - unstab
    inv_gmb = 1.0 / (g - b + _EPS)
    ab = a / b
    ag = a / g
    c1 = a * inv_gmb * stab
    c2 = a * unstab

    # State at switching time toff: pred_su(relu(toff - ton), 0, 0, alpha, beta, gamma).
    tau0 = jnp.maximum(toff_e - ton_e, 0.0)
    expb0 = jnp.exp(-b * tau0)
    expg0 = jnp.exp(-g * tau0)
    u0_ = ab * (1.0 - expb0)
    s0_ = ag * (1.0 - expg0) + c1 * (expg0 - expb0) + c2 * (tau0 * expg0)
    d1 = -b * u0_ * inv_gmb * stab
    d2 = -b * u0_ * unstab

    rows = [jnp.zeros((Gp,), jnp.float32)] * _NROWS
    rows[_ROW_TON] = ton_e
    rows[_ROW_TOFF] = toff_e
    rows[_ROW_BETA] = b
    rows[_ROW_GAMMA] = g
    rows[_ROW_AB] = ab
    rows[_ROW_AG] = ag
    rows[_ROW_C1] = c1
    rows[_ROW_C2] = c2
    rows[_ROW_U0] = u0_
    rows[_ROW_S0] = s0_
    rows[_ROW_D1] = d1
    rows[_ROW_D2] = d2
    rows[_ROW_SC] = sc
    params = jnp.stack(rows, axis=0)                 # (16, Gp)

    # ---- generation-aware tile sizing & VMEM budget -----------------------------
    kind = _device_kind()
    is_v7 = ("v7" in kind) or ("7x" in kind)
    if vmem_limit_bytes is None:
        # v7x has 64 MiB physical per TC -> keep scoped limit well under it;
        # v5e/v6e have 128 MiB -> allow larger blocks.
        vmem_limit_bytes = (48 << 20) if is_v7 else (96 << 20)
    # Target bytes per f32 output block (two outputs, double-buffered by Pallas).
    target_block_bytes = (1 << 20) if is_v7 else (4 << 20)

    out_bytes = jnp.dtype(out_dtype).itemsize

    # Gene-axis tiling: whole gene axis per block unless G is very large.
    gene_tile = 2048 if is_v7 else 8192
    if Gp <= gene_tile:
        tg = Gp
    else:
        tg = gene_tile
        Gp = _round_up(Gp, tg)
        params = jnp.pad(params, ((0, 0), (0, Gp - params.shape[1])))

    N8 = _round_up(N, 8)
    if tn is None:
        tn = target_block_bytes // (tg * 4)
        tn = max(8, min(2048, (tn // 8) * 8))
        # Never pad a small batch all the way up to a big tile.
        tn = min(tn, N8)
        # Guarantee >=2 grid steps along N (megacore split on v7x) when possible.
        if N8 >= 16 and -(-N8 // tn) < 2:
            tn = max(8, ((N8 // 2) // 8) * 8)
    Np = _round_up(N8, tn)
    tp = jnp.pad(t, ((0, Np - N), (0, 0)))

    kernel = functools.partial(_decoder_fwd_kernel, neg_slope=float(neg_slope))

    cost = pl.CostEstimate(
        flops=16 * Np * Gp,
        transcendentals=2 * Np * Gp,
        bytes_accessed=2 * Np * Gp * out_bytes + 4 * Np + 4 * _NROWS * Gp,
    )

    uhat, shat = pl.pallas_call(
        kernel,
        out_shape=(jax.ShapeDtypeStruct((Np, Gp), out_dtype),
                   jax.ShapeDtypeStruct((Np, Gp), out_dtype)),
        grid_spec=pltpu.PrefetchScalarGridSpec(
            num_scalar_prefetch=0,
            grid=(Np // tn, Gp // tg),
            in_specs=[pl.BlockSpec((tn, 1), lambda i, j: (i, 0)),
                      pl.BlockSpec((_NROWS, tg), lambda i, j: (0, j))],
            out_specs=[pl.BlockSpec((tn, tg), lambda i, j: (i, j)),
                       pl.BlockSpec((tn, tg), lambda i, j: (i, j))],
        ),
        compiler_params=pltpu.CompilerParams(
            dimension_semantics=("parallel", "parallel"),
            vmem_limit_bytes=vmem_limit_bytes),
        cost_estimate=cost,
    )(tp, params)

    if Np != N or Gp != G:
        uhat = uhat[:N, :G]
        shat = shat[:N, :G]
    return uhat, shat


def _reference_forward(t, alpha, beta, gamma, ton, toff, scaling,
                       neg_slope=0.0):
    """Pure-JAX reference mirroring the PyTorch semantics (unspecialized pred_su)."""
    t = jnp.asarray(t, jnp.float32).reshape(-1, 1)
    a = jnp.exp(alpha)[None, :]
    b = jnp.exp(beta)[None, :]
    g = jnp.exp(gamma)[None, :]
    to = jnp.exp(ton)[None, :]
    tf = jnp.exp(toff)[None, :]
    sc = jnp.exp(scaling)[None, :]
    eps = 1e-6
    unstab = (jnp.abs(b - g) < eps).astype(jnp.float32)

    def leaky(x):
        return jnp.where(x >= 0, x, neg_slope * x)

    def pred_su(tau, u0, s0, aa, bb, gg):
        expb = jnp.exp(-bb * tau)
        expg = jnp.exp(-gg * tau)
        uhat = u0 * expb + aa / bb * (1 - expb)
        shat = (s0 * expg + aa / gg * (1 - expg)
                + (aa - bb * u0) / (gg - bb + eps) * (expg - expb) * (1 - unstab)
                + (aa - bb * u0) * tau * expg * unstab)
        return uhat, shat

    o = (t <= tf).astype(jnp.float32)
    u_on, s_on = pred_su(leaky(t - to), 0.0, 0.0, a, b, g)
    u0_, s0_ = pred_su(jnp.maximum(tf - to, 0.0), 0.0, 0.0, a, b, g)
    u_off, s_off = pred_su(leaky(t - tf), u0_, s0_, 0.0, b, g)
    uhat = (u_on * o + u_off * (1 - o)) * sc
    shat = s_on * o + s_off * (1 - o)
    return jnp.maximum(uhat, 0.0), jnp.maximum(shat, 0.0)


def _make_inputs(key, N, G):
    ks = jax.random.split(key, 8)
    # log-scale parameters, as in init_method='random'
    alpha = 0.01 * jax.random.normal(ks[0], (G,), jnp.float32)
    beta = 0.01 * jax.random.normal(ks[1], (G,), jnp.float32)
    gamma = 0.01 * jax.random.normal(ks[2], (G,), jnp.float32)
    ton = 0.01 * jax.random.normal(ks[3], (G,), jnp.float32)
    toff = ton + jnp.abs(0.5 * jax.random.normal(ks[4], (G,), jnp.float32))
    scaling = 0.01 * jax.random.normal(ks[5], (G,), jnp.float32)
    t = 2.0 * jax.random.uniform(ks[7], (N, 1), jnp.float32)
    return t, alpha, beta, gamma, ton, toff, scaling


if __name__ == "__main__":
    key = jax.random.PRNGKey(0)
    configs = [
        (16, 256, 0.0),    # aligned shapes
        (13, 200, 0.0),    # exercises N/G padding path
        (16, 256, 0.01),   # non-zero leaky slope
    ]
    for idx, (N, G, ns) in enumerate(configs):
        t, alpha, beta, gamma, ton, toff, scaling = _make_inputs(
            jax.random.fold_in(key, idx), N, G)
        uhat, shat = decoder_forward(t, alpha, beta, gamma, ton, toff, scaling,
                                     neg_slope=ns)
        jax.block_until_ready((uhat, shat))
        u_ref, s_ref = _reference_forward(t, alpha, beta, gamma, ton, toff,
                                          scaling, neg_slope=ns)
        assert uhat.shape == (N, G) and shat.shape == (N, G)
        assert jnp.allclose(uhat, u_ref, atol=1e-5, rtol=1e-5), f"Uhat mismatch cfg {idx}"
        assert jnp.allclose(shat, s_ref, atol=1e-5, rtol=1e-5), f"Shat mismatch cfg {idx}"

    print("KERNEL_OK")
</pallas_src>

<mosaic_0001>
module attributes {stable_mosaic.version = 11 : i64} {
  func.func @_decoder_fwd_kernel(%arg0: i32, %arg1: i32, %arg2: memref<8x1xf32, #tpu.memory_space<vmem>>, %arg3: memref<16x256xf32, #tpu.memory_space<vmem>>, %arg4: memref<8x256xf32, #tpu.memory_space<vmem>>, %arg5: memref<8x256xf32, #tpu.memory_space<vmem>>) attributes {dimension_semantics = [#tpu.dimension_semantics<parallel>, #tpu.dimension_semantics<parallel>], iteration_bounds = array<i64: 2, 1>, scalar_prefetch = 0 : i64, scratch_operands = 0 : i64, tpu.core_type = #tpu.core_type<tc>, window_params = [{transform_indices = @transform_0, window_bounds = array<i64: 8, 1>}, {transform_indices = @transform_1, window_bounds = array<i64: 16, 256>}, {transform_indices = @transform_2, window_bounds = array<i64: 8, 256>}, {transform_indices = @transform_3, window_bounds = array<i64: 8, 256>}]} {
    %c0 = arith.constant 0 : index
    %c0_0 = arith.constant 0 : index
    %0 = vector.load %arg3[%c0, %c0_0] : memref<16x256xf32, #tpu.memory_space<vmem>>, vector<16x256xf32>
    %1 = vector.extract_strided_slice %0 {offsets = [0, 0], sizes = [1, 256], strides = [1, 1]} : vector<16x256xf32> to vector<1x256xf32>
    %2 = vector.extract_strided_slice %0 {offsets = [1, 0], sizes = [1, 256], strides = [1, 1]} : vector<16x256xf32> to vector<1x256xf32>
    %3 = vector.extract_strided_slice %0 {offsets = [2, 0], sizes = [1, 256], strides = [1, 1]} : vector<16x256xf32> to vector<1x256xf32>
    %4 = vector.extract_strided_slice %0 {offsets = [3, 0], sizes = [1, 256], strides = [1, 1]} : vector<16x256xf32> to vector<1x256xf32>
    %5 = vector.extract_strided_slice %0 {offsets = [4, 0], sizes = [1, 256], strides = [1, 1]} : vector<16x256xf32> to vector<1x256xf32>
    %6 = vector.extract_strided_slice %0 {offsets = [5, 0], sizes = [1, 256], strides = [1, 1]} : vector<16x256xf32> to vector<1x256xf32>
    %7 = vector.extract_strided_slice %0 {offsets = [6, 0], sizes = [1, 256], strides = [1, 1]} : vector<16x256xf32> to vector<1x256xf32>
    %8 = vector.extract_strided_slice %0 {offsets = [7, 0], sizes = [1, 256], strides = [1, 1]} : vector<16x256xf32> to vector<1x256xf32>
    %9 = vector.extract_strided_slice %0 {offsets = [8, 0], sizes = [1, 256], strides = [1, 1]} : vector<16x256xf32> to vector<1x256xf32>
    %10 = vector.extract_strided_slice %0 {offsets = [9, 0], sizes = [1, 256], strides = [1, 1]} : vector<16x256xf32> to vector<1x256xf32>
    %11 = vector.extract_strided_slice %0 {offsets = [10, 0], sizes = [1, 256], strides = [1, 1]} : vector<16x256xf32> to vector<1x256xf32>
    %12 = vector.extract_strided_slice %0 {offsets = [11, 0], sizes = [1, 256], strides = [1, 1]} : vector<16x256xf32> to vector<1x256xf32>
    %13 = vector.extract_strided_slice %0 {offsets = [12, 0], sizes = [1, 256], strides = [1, 1]} : vector<16x256xf32> to vector<1x256xf32>
    %c0_1 = arith.constant 0 : index
    %c0_2 = arith.constant 0 : index
    %14 = vector.load %arg2[%c0_1, %c0_2] : memref<8x1xf32, #tpu.memory_space<vmem>>, vector<8x1xf32>
    %15 = vector.shape_cast %14 : vector<8x1xf32> to vector<8x1xf32>
    %16 = vector.broadcast %15 : vector<8x1xf32> to vector<8x256xf32>
    %17 = vector.broadcast %2 : vector<1x256xf32> to vector<8x256xf32>
    %18 = arith.cmpf ole, %16, %17 : vector<8x256xf32>
    %19 = vector.broadcast %1 : vector<1x256xf32> to vector<8x256xf32>
    %20 = arith.subf %16, %19 : vector<8x256xf32>
    %21 = vector.broadcast %2 : vector<1x256xf32> to vector<8x256xf32>
    %22 = arith.subf %16, %21 : vector<8x256xf32>
    %23 = arith.select %18, %20, %22 : vector<8x256xi1>, vector<8x256xf32>
    %cst = arith.constant 0.000000e+00 : f32
    %24 = vector.broadcast %cst : f32 to vector<8x256xf32>
    %25 = arith.maximumf %23, %24 : vector<8x256xf32>
    %cst_3 = arith.constant 0.000000e+00 : f32
    %26 = vector.broadcast %cst_3 : f32 to vector<1x256xf32>
    %27 = arith.subf %26, %3 : vector<1x256xf32>
    %28 = vector.broadcast %27 : vector<1x256xf32> to vector<8x256xf32>
    %29 = arith.mulf %28, %25 : vector<8x256xf32>
    %30 = math.exp %29 : vector<8x256xf32>
    %cst_4 = arith.constant 0.000000e+00 : f32
    %31 = vector.broadcast %cst_4 : f32 to vector<1x256xf32>
    %32 = arith.subf %31, %4 : vector<1x256xf32>
    %33 = vector.broadcast %32 : vector<1x256xf32> to vector<8x256xf32>
    %34 = arith.mulf %33, %25 : vector<8x256xf32>
    %35 = math.exp %34 : vector<8x256xf32>
    %cst_5 = arith.constant 1.000000e+00 : f32
    %36 = vector.broadcast %cst_5 : f32 to vector<8x256xf32>
    %37 = arith.subf %36, %30 : vector<8x256xf32>
    %38 = vector.broadcast %5 : vector<1x256xf32> to vector<8x256xf32>
    %39 = arith.mulf %38, %37 : vector<8x256xf32>
    %40 = vector.broadcast %9 : vector<1x256xf32> to vector<8x256xf32>
    %41 = arith.mulf %40, %30 : vector<8x256xf32>
    %42 = arith.select %18, %39, %41 : vector<8x256xi1>, vector<8x256xf32>
    %cst_6 = arith.constant 1.000000e+00 : f32
    %43 = vector.broadcast %cst_6 : f32 to vector<8x256xf32>
    %44 = arith.subf %43, %35 : vector<8x256xf32>
    %45 = vector.broadcast %6 : vector<1x256xf32> to vector<8x256xf32>
    %46 = arith.mulf %45, %44 : vector<8x256xf32>
    %47 = vector.broadcast %10 : vector<1x256xf32> to vector<8x256xf32>
    %48 = arith.mulf %47, %35 : vector<8x256xf32>
    %49 = arith.select %18, %46, %48 : vector<8x256xi1>, vector<8x256xf32>
    %50 = vector.shape_cast %7 : vector<1x256xf32> to vector<1x256xf32>
    %51 = vector.broadcast %50 : vector<1x256xf32> to vector<8x256xf32>
    %52 = vector.shape_cast %11 : vector<1x256xf32> to vector<1x256xf32>
    %53 = vector.broadcast %52 : vector<1x256xf32> to vector<8x256xf32>
    %54 = arith.select %18, %51, %53 : vector<8x256xi1>, vector<8x256xf32>
    %55 = arith.subf %35, %30 : vector<8x256xf32>
    %56 = arith.mulf %54, %55 : vector<8x256xf32>
    %57 = arith.addf %49, %56 : vector<8x256xf32>
    %58 = vector.shape_cast %8 : vector<1x256xf32> to vector<1x256xf32>
    %59 = vector.broadcast %58 : vector<1x256xf32> to vector<8x256xf32>
    %60 = vector.shape_cast %12 : vector<1x256xf32> to vector<1x256xf32>
    %61 = vector.broadcast %60 : vector<1x256xf32> to vector<8x256xf32>
    %62 = arith.select %18, %59, %61 : vector<8x256xi1>, vector<8x256xf32>
    %63 = arith.mulf %25, %35 : vector<8x256xf32>
    %64 = arith.mulf %62, %63 : vector<8x256xf32>
    %65 = arith.addf %57, %64 : vector<8x256xf32>
    %66 = vector.broadcast %13 : vector<1x256xf32> to vector<8x256xf32>
    %67 = arith.mulf %42, %66 : vector<8x256xf32>
    %cst_7 = arith.constant 0.000000e+00 : f32
    %68 = vector.broadcast %cst_7 : f32 to vector<8x256xf32>
    %69 = arith.maximumf %67, %68 : vector<8x256xf32>
    %c0_8 = arith.constant 0 : index
    %c0_9 = arith.constant 0 : index
    %70 = vector.load %arg4[%c0_8, %c0_9] : memref<8x256xf32, #tpu.memory_space<vmem>>, vector<8x256xf32>
    tpu.vector_store %arg4[%c0_8, %c0_9], %69 {strides = array<i32>} : memref<8x256xf32, #tpu.memory_space<vmem>>, vector<8x256xf32>,
    %cst_10 = arith.constant 0.000000e+00 : f32
    %71 = vector.broadcast %cst_10 : f32 to vector<8x256xf32>
    %72 = arith.maximumf %65, %71 : vector<8x256xf32>
    %c0_11 = arith.constant 0 : index
    %c0_12 = arith.constant 0 : index
    %73 = vector.load %arg5[%c0_11, %c0_12] : memref<8x256xf32, #tpu.memory_space<vmem>>, vector<8x256xf32>
    tpu.vector_store %arg5[%c0_11, %c0_12], %72 {strides = array<i32>} : memref<8x256xf32, #tpu.memory_space<vmem>>, vector<8x256xf32>,
    return
  }
  func.func @transform_0(%arg0: i32, %arg1: i32) -> (i32, i32) {
    %c0_i32 = arith.constant 0 : i32
    %c0_i32_0 = arith.constant 0 : i32
    return %arg0, %c0_i32 : i32, i32
  }
  func.func @transform_1(%arg0: i32, %arg1: i32) -> (i32, i32) {
    %c0_i32 = arith.constant 0 : i32
    %c0_i32_0 = arith.constant 0 : i32
    return %c0_i32, %arg1 : i32, i32
  }
  func.func @transform_2(%arg0: i32, %arg1: i32) -> (i32, i32) {
    %c0_i32 = arith.constant 0 : i32
    return %arg0, %arg1 : i32, i32
  }
  func.func @transform_3(%arg0: i32, %arg1: i32) -> (i32, i32) {
    %c0_i32 = arith.constant 0 : i32
    return %arg0, %arg1 : i32, i32
  }
}

</mosaic_0001>

<llo_original>
// kernel: tpu_custom_call.1
$region0: #{tpu_custom_call.1}
  #allocation0 [shape = 'u32[]', space=smem, size = 0x4, offset = 0x4, fixed_abs, tag = 'smem constant byte address 0x4 - core index']
  #allocation1 [shape = 'u32[144,128]{1,0:T(1,128)}', space=vmem, size = 0x12000, scoped, tag = 'internal scratch']
  %s0 = inlined_call_operand.hbm [shape: f32[16,1], index: 0, kind: input, shape index: {}]
  %s1 = inlined_call_operand.hbm [shape: f32[16,256], index: 1, kind: input, shape index: {}]
  %s2 = inlined_call_operand.hbm [shape: f32[16,256], index: 2, kind: output, shape index: {0}]
  %s3 = inlined_call_operand.hbm [shape: f32[16,256], index: 3, kind: output, shape index: {1}]
  %4 = xla_tuple %s2, %s3
  %s5 = sld [smem:[#allocation0]]
  $region57: #{tpu_custom_call.1} parent=0
    _
  %s7 = ssub.s32 1, %s5
  %s8 = scalar_select 0, %s7, %s5
  $region1: #{tpu_custom_call.1} parent=0
    #allocation2 [shape = 'u8[8192]{0}', space=vmem, size = 0x2000, scoped, tag = 'input window, operand 0']
    #allocation3 [shape = 's32[2]{0}', space=sflag, size = 0x8, scoped, tag = 'scoped memory for tpu_custom_call.1']
    #allocation4 [shape = 's32[2]{0}', space=sflag, size = 0x8, scoped, tag = 'scoped memory for tpu_custom_call.1']
    #allocation5 [shape = 'u8[16384]{0}', space=vmem, size = 0x4000, scoped, tag = 'input window, operand 1, single buffered']
    #allocation6 [shape = 's32[1]{0}', space=sflag, size = 0x4, scoped, tag = 'scoped memory for tpu_custom_call.1']
    #allocation7 [shape = 'u8[16384]{0}', space=vmem, size = 0x4000, scoped, tag = 'output window, operand 0']
    #allocation8 [shape = 'u8[16384]{0}', space=vmem, size = 0x4000, scoped, tag = 'output window, operand 1']
    #allocation9 [shape = 's32[2]{0}', space=sflag, size = 0x8, scoped, tag = 'scoped memory for tpu_custom_call.1']
    %9 = vsyncpa [#allocation3], 0
    %s10 = scalar_lea.sflag [#allocation3], 1
    %11 = vsyncpa %s10, 0
    %12 = vsyncpa [#allocation6], 0
    %13 = vsyncpa [#allocation4], 0
    %s14 = scalar_lea.sflag [#allocation4], 1
    %15 = vsyncpa %s14, 0
    %16 = vsyncpa [#allocation9], 0
    %s17 = scalar_lea.sflag [#allocation9], 1
    %18 = vsyncpa %s17, 0
    loop: start=0, step=1, limit=4
    $region2: #{tpu_custom_call.1} parent=1 // loop_pre_header
      _
    $region3: #{tpu_custom_call.1} parent=1 // loop_header
      %s20 = sphi 0, %s24
      %p21 = scmp.ge.s32.totalorder %s20, 4
      %s27 = sphi 0, %s39
      %s28 = sphi 0, %s35
      %s29 = sphi 0, %s27
      %s30 = sphi 0, %s28
      %s31 = sphi 0, %s29
      %s32 = sphi 0, %s30
      %s42 = sphi 0, %s44
      %s45 = sphi 0, %s42
      %s46 = sphi 0, %s45
      %s62 = sphi 0, %s46
      %s68 = sphi 0, %s70
      %s71 = sphi 0, %s68
      %s72 = sphi 0, %s71
      %s88 = sphi 0, %s72
      %s96 = sphi 0, %s98
      %s99 = sphi 0, %s96
      %s100 = sphi 0, %s99
      %s116 = sphi 0, %s100
      %s124 = sphi 0, %s126
      %s127 = sphi 0, %s124
      %s128 = sphi 0, %s127
      %s144 = sphi 0, %s128
    $region4: #{tpu_custom_call.1} parent=1 // loop_header_branch
      %23 = sbr.rel (%p21) target = $region8
    $region5: #{tpu_custom_call.1} parent=1 // loop_body
      %s25 = ssub.s32 %s20, 1
      %s26 = ssub.s32 %s20, 2
      %s33 = sadd.s32 1, %s28
      %p34 = scmp.ge.s32.totalorder %s33, 1
      %s35 = scalar_select %p34, 0, %s33
      %s36 = sadd.s32 1, %s27
      %s37 = scalar_select %p34, %s36, %s27
      %p38 = scmp.ge.s32.totalorder %s37, 2
      %s39 = scalar_select %p38, 0, %s37
      %s40 = ssub.s32 %s27, %s39
      %p41 = scmp.eq.s32.totalorder %s40, 0
      %s43 = sadd.s32 %s42, 1
      %s44 = scalar_select %p41, %s42, %s43
      %p47 = pneg %p41
      %p48 = scmp.eq.s32.totalorder %s20, 1
      %p49 = por %p47, %p48
      %p50 = scmp.ne.s32.totalorder %s42, %s45
      %p51 = scmp.eq.s32.totalorder %s20, 0
      %p52 = por %p50, %p51
      %p53 = scmp.ne.s32.totalorder %s42, %s45
      %p54 = scmp.eq.s32.totalorder %s25, 1
      %p55 = por %p53, %p54
      %p56 = scmp.ne.s32.totalorder %s45, %s46
      %p57 = scmp.eq.s32.totalorder %s25, 0
      %p58 = por %p56, %p57
      %p59 = scmp.ne.s32.totalorder %s45, %s46
      %p60 = scmp.eq.s32.totalorder %s26, 1
      %p61 = por %p59, %p60
      %p63 = scmp.ne.s32.totalorder %s46, %s62
      %p64 = scmp.eq.s32.totalorder %s26, 0
      %p65 = por %p63, %p64
      %s66 = ssub.s32 %s28, %s35
      %p67 = scmp.eq.s32.totalorder %s66, 0
      %s69 = sadd.s32 %s68, 1
      %s70 = scalar_select %p67, %s68, %s69
      %p73 = pneg %p67
      %p74 = scmp.eq.s32.totalorder %s20, 1
      %p75 = por %p73, %p74
      %p76 = scmp.ne.s32.totalorder %s68, %s71
      %p77 = scmp.eq.s32.totalorder %s20, 0
      %p78 = por %p76, %p77
      %p79 = scmp.ne.s32.totalorder %s68, %s71
      %p80 = scmp.eq.s32.totalorder %s25, 1
      %p81 = por %p79, %p80
      %p82 = scmp.ne.s32.totalorder %s71, %s72
      %p83 = scmp.eq.s32.totalorder %s25, 0
      %p84 = por %p82, %p83
      %p85 = scmp.ne.s32.totalorder %s71, %s72
      %p86 = scmp.eq.s32.totalorder %s26, 1
      %p87 = por %p85, %p86
      %p89 = scmp.ne.s32.totalorder %s72, %s88
      %p90 = scmp.eq.s32.totalorder %s26, 0
      %p91 = por %p89, %p90
      %s92 = ssub.s32 %s27, %s39
      %s93 = ssub.s32 %s28, %s35
      %s94 = sor.u32 %s92, %s93
      %p95 = scmp.eq.s32.totalorder %s94, 0
      %s97 = sadd.s32 %s96, 1
      %s98 = scalar_select %p95, %s96, %s97
      %p101 = pneg %p95
      %p102 = scmp.eq.s32.totalorder %s20, 1
      %p103 = por %p101, %p102
      %p104 = scmp.ne.s32.totalorder %s96, %s99
      %p105 = scmp.eq.s32.totalorder %s20, 0
      %p106 = por %p104, %p105
      %p107 = scmp.ne.s32.totalorder %s96, %s99
      %p108 = scmp.eq.s32.totalorder %s25, 1
      %p109 = por %p107, %p108
      %p110 = scmp.ne.s32.totalorder %s99, %s100
      %p111 = scmp.eq.s32.totalorder %s25, 0
      %p112 = por %p110, %p111
      %p113 = scmp.ne.s32.totalorder %s99, %s100
      %p114 = scmp.eq.s32.totalorder %s26, 1
      %p115 = por %p113, %p114
      %p117 = scmp.ne.s32.totalorder %s100, %s116
      %p118 = scmp.eq.s32.totalorder %s26, 0
      %p119 = por %p117, %p118
      %s120 = ssub.s32 %s27, %s39
      %s121 = ssub.s32 %s28, %s35
      %s122 = sor.u32 %s120, %s121
      %p123 = scmp.eq.s32.totalorder %s122, 0
      %s125 = sadd.s32 %s124, 1
      %s126 = scalar_select %p123, %s124, %s125
      %p129 = pneg %p123
      %p130 = scmp.eq.s32.totalorder %s20, 1
      %p131 = por %p129, %p130
      %p132 = scmp.ne.s32.totalorder %s124, %s127
      %p133 = scmp.eq.s32.totalorder %s20, 0
      %p134 = por %p132, %p133
      %p135 = scmp.ne.s32.totalorder %s124, %s127
      %p136 = scmp.eq.s32.totalorder %s25, 1
      %p137 = por %p135, %p136
      %p138 = scmp.ne.s32.totalorder %s127, %s128
      %p139 = scmp.eq.s32.totalorder %s25, 0
      %p140 = por %p138, %p139
      %p141 = scmp.ne.s32.totalorder %s127, %s128
      %p142 = scmp.eq.s32.totalorder %s26, 1
      %p143 = por %p141, %p142
      %p145 = scmp.ne.s32.totalorder %s128, %s144
      %p146 = scmp.eq.s32.totalorder %s26, 0
      %p147 = por %p145, %p146
      %p148 = scmp.le.s32.totalorder 1, %s20
      %p149 = scmp.lt.s32.totalorder %s20, 3
      %p150 = pnand %p148, %p149
      %p151 = pneg %p150
      // Predicated region
      $region9: #{tpu_custom_call.1} parent=5 // pred_check
        _
      $region10: #{tpu_custom_call.1} parent=5 // pred_check_branch
        %153 = sbr.rel (%p150) target = $region12
      $region11: #{tpu_custom_call.1} parent=5 // pred_region
        %s154 = ssub.s32 %s20, 1
        // Predicated region
        $region13: #{tpu_custom_call.1} parent=11 // pred_check
          %p155 = pneg %p84
        $region14: #{tpu_custom_call.1} parent=11 // pred_check_branch
          %157 = sbr.rel (%p155) target = $region16
        $region15: #{tpu_custom_call.1} parent=11 // pred_region
          %s158 = smul.u32 2, %s30
          %s160 = ssub.s32 512, 512
          %161 = vsyncadd [#allocation6], %s160
          %s162 = smul.addr %s158, 128
          %s163 = scalar_lea.hbm %s1, %s162
          %s164 = sshll.u32 [#allocation5], 4
          %s165 = int_to_ptr.vmem [resolvable:$true] %s164
          %170 = dma.hbm_to_vmem [thread:$0]  %s163, 512, %s165, [#allocation6], 256, 256, 16
        $region16: #{tpu_custom_call.1} parent=11 // pred_fallthru
          _
      $region12: #{tpu_custom_call.1} parent=5 // pred_fallthru
        _
      %p171 = scmp.lt.s32.totalorder %s20, 2
      // Predicated region
      $region17: #{tpu_custom_call.1} parent=5 // pred_check
        %p172 = pneg %p171
      $region18: #{tpu_custom_call.1} parent=5 // pred_check_branch
        %174 = sbr.rel (%p172) target = $region20
      $region19: #{tpu_custom_call.1} parent=5 // pred_region
        // Predicated region
        $region21: #{tpu_custom_call.1} parent=19 // pred_check
          %p175 = pneg %p52
        $region22: #{tpu_custom_call.1} parent=19 // pred_check_branch
          %177 = sbr.rel (%p175) target = $region24
        $region23: #{tpu_custom_call.1} parent=19 // pred_region
          %s178 = sand.u32 %s42, 1
          %s179 = scalar_lea.sflag [#allocation3], %s178
          %s180 = sand.u32 %s42, 1
          %s181 = smul.addr %s180, 8
          %s182 = scalar_lea.vmem [#allocation2], %s181
          %s184 = ssub.s32 128, 128
          %185 = vsyncadd %s179, %s184
          %s186 = smul.addr %s27, 128
          %s187 = scalar_lea.hbm %s0, %s186
          %s189 = sshll.u32 %s182, 4
          %s190 = int_to_ptr.vmem [resolvable:$true] %s189
          %192 = dma.hbm_to_vmem [thread:$0]  %s187, 128, %s190, %s179
        $region24: #{tpu_custom_call.1} parent=19 // pred_fallthru
          _
      $region20: #{tpu_custom_call.1} parent=5 // pred_fallthru
        _
      %p193 = scmp.le.s32.totalorder 1, %s20
      %p194 = scmp.lt.s32.totalorder %s20, 3
      %p195 = pnand %p193, %p194
      %p196 = pneg %p195
      // Predicated region
      $region25: #{tpu_custom_call.1} parent=5 // pred_check
        _
      $region26: #{tpu_custom_call.1} parent=5 // pred_check_branch
        %198 = sbr.rel (%p195) target = $region28
      $region27: #{tpu_custom_call.1} parent=5 // pred_region
        %s199 = ssub.s32 %s20, 1
        %s200 = sand.u32 %s45, 1
        %s201 = scalar_lea.sflag [#allocation3], %s200
        %s202 = sand.u32 %s45, 1
        %s203 = smul.addr %s202, 8
        %s204 = scalar_lea.vmem [#allocation2], %s203
        // Predicated region
        $region29: #{tpu_custom_call.1} parent=27 // pred_check
          %p205 = pneg %p58
        $region30: #{tpu_custom_call.1} parent=27 // pred_check_branch
          %207 = sbr.rel (%p205) target = $region32
        $region31: #{tpu_custom_call.1} parent=27 // pred_region
          %208 = dma.done %s201, 128
        $region32: #{tpu_custom_call.1} parent=27 // pred_fallthru
          _
        // Predicated region
        $region33: #{tpu_custom_call.1} parent=27 // pred_check
          %p209 = pneg %p84
        $region34: #{tpu_custom_call.1} parent=27 // pred_check_branch
          %211 = sbr.rel (%p209) target = $region36
        $region35: #{tpu_custom_call.1} parent=27 // pred_region
          %212 = dma.done [#allocation6], 512
        $region36: #{tpu_custom_call.1} parent=27 // pred_fallthru
          _
        %s213 = sand.u32 %s45, 1
        %s214 = scalar_lea.sflag [#allocation3], %s213
        %s215 = sand.u32 %s45, 1
        %s216 = smul.addr %s215, 8
        %s217 = scalar_lea.vmem [#allocation2], %s216
        %p218 = pneg %p58
        %p219 = pneg %p55
        %p220 = pneg %p84
        %p221 = pneg %p81
        %p222 = pneg %p112
        %p223 = pneg %p109
        %s224 = sand.u32 %s99, 1
        %s225 = scalar_lea.sflag [#allocation4], %s224
        %s226 = sand.u32 %s99, 1
        %s227 = smul.addr %s226, 16
        %s228 = scalar_lea.vmem [#allocation7], %s227
        %p229 = pneg %p140
        %p230 = pneg %p137
        %s231 = sand.u32 %s127, 1
        %s232 = scalar_lea.sflag [#allocation9], %s231
        %s233 = sand.u32 %s127, 1
        %s234 = smul.addr %s233, 16
        %s235 = scalar_lea.vmem [#allocation8], %s234
        %s236 = smul.u32 2, %s30
        %s237 = smul.u32 2, %s30
        %s238 = smul.u32 2, %s30
        %v239 = vld [vmem:[#allocation5] sm:$0xff]
        %v240 = vld [vmem:[#allocation5 + $0x8] sm:$0xff]
        %v241 = vld [vmem:[#allocation5 + $0x10] sm:$0xff]
        %v242 = vld [vmem:[#allocation5 + $0x18] sm:$0xff]
        %v243 = vld [vmem:[%s204] sm:$0xff]
        %245 = vset.pattern.permute.xlu0 0
        %246 = vperm.xlu0 %245, %v243
        %v247 = vpop.permute.xlu0 %246
        %v249 = vlaneseq
        %v250 = vshrl.u32 %v249, 7
        %v251 = vsub.s32 1, %v250
        %v252 = vrot.slane %v239, %v251
        %v253 = vlaneseq
        %v254 = vshrl.u32 %v253, 7
        %v255 = vsub.s32 1, %v254
        %v256 = vrot.slane %v240, %v255
        %vm257 = vcmp.le.f32.partialorder %v247, %v252
        %vm258 = vcmp.le.f32.partialorder %v247, %v256
        %v259 = vlaneseq
        %v260 = vshrl.u32 %v259, 7
        %v261 = vsub.s32 0, %v260
        %v262 = vrot.slane %v239, %v261
        %v263 = vlaneseq
        %v264 = vshrl.u32 %v263, 7
        %v265 = vsub.s32 0, %v264
        %v266 = vrot.slane %v240, %v265
        %v267 = vsub.f32 %v247, %v262
        %v268 = vsub.f32 %v247, %v266
        %v269 = vsub.f32 %v247, %v252
        %v270 = vsub.f32 %v247, %v256
        %v271 = vsel %vm257, %v267, %v269
        %v272 = vsel %vm258, %v268, %v270
        %v273 = vmax.f32 %v271, 0.0
        %v274 = vmax.f32 %v272, 0.0
        %v275 = vsub.f32 0.0, %v239
        %v276 = vsub.f32 0.0, %v240
        %v277 = vlaneseq
        %v278 = vshrl.u32 %v277, 7
        %v279 = vsub.s32 2, %v278
        %v280 = vrot.slane %v275, %v279
        %v281 = vlaneseq
        %v282 = vshrl.u32 %v281, 7
        %v283 = vsub.s32 2, %v282
        %v284 = vrot.slane %v276, %v283
        %v285 = vmul.f32 %v280, %v273
        %v286 = vmul.f32 %v284, %v274
        %v287 = vmul.f32 %v285, 1.442695
        %v288 = vpow.pop %v287
        %v289 = vmul.f32 %v286, 1.442695
        %v290 = vpow.pop %v289
        %v291 = vlaneseq
        %v292 = vshrl.u32 %v291, 7
        %v293 = vsub.s32 3, %v292
        %v294 = vrot.slane %v275, %v293
        %v295 = vlaneseq
        %v296 = vshrl.u32 %v295, 7
        %v297 = vsub.s32 3, %v296
        %v298 = vrot.slane %v276, %v297
        %v299 = vmul.f32 %v294, %v273
        %v300 = vmul.f32 %v298, %v274
        %v301 = vmul.f32 %v299, 1.442695
        %v302 = vpow.pop %v301
        %v303 = vmul.f32 %v300, 1.442695
        %v304 = vpow.pop %v303
        %v305 = vsub.f32 1.0, %v288
        %v306 = vsub.f32 1.0, %v290
        %v307 = vlaneseq
        %v308 = vshrl.u32 %v307, 7
        %v309 = vsub.s32 4, %v308
        %v310 = vrot.slane %v239, %v309
        %v311 = vlaneseq
        %v312 = vshrl.u32 %v311, 7
        %v313 = vsub.s32 4, %v312
        %v314 = vrot.slane %v240, %v313
        %v315 = vmul.f32 %v310, %v305
        %v316 = vmul.f32 %v314, %v306
        %v317 = vlaneseq
        %v318 = vshrl.u32 %v317, 7
        %v319 = vsub.s32 0, %v318
        %v320 = vrot.slane %v241, %v319
        %v321 = vlaneseq
        %v322 = vshrl.u32 %v321, 7
        %v323 = vsub.s32 0, %v322
        %v324 = vrot.slane %v242, %v323
        %v325 = vmul.f32 %v320, %v288
        %v326 = vmul.f32 %v324, %v290
        %v327 = vsel %vm257, %v315, %v325
        %v328 = vsel %vm258, %v316, %v326
        %v329 = vsub.f32 1.0, %v302
        %v330 = vsub.f32 1.0, %v304
        %v331 = vlaneseq
        %v332 = vshrl.u32 %v331, 7
        %v333 = vsub.s32 5, %v332
        %v334 = vrot.slane %v239, %v333
        %v335 = vlaneseq
        %v336 = vshrl.u32 %v335, 7
        %v337 = vsub.s32 5, %v336
        %v338 = vrot.slane %v240, %v337
        %v339 = vmul.f32 %v334, %v329
        %v340 = vmul.f32 %v338, %v330
        %v341 = vlaneseq
        %v342 = vshrl.u32 %v341, 7
        %v343 = vsub.s32 1, %v342
        %v344 = vrot.slane %v241, %v343
        %v345 = vlaneseq
        %v346 = vshrl.u32 %v345, 7
        %v347 = vsub.s32 1, %v346
        %v348 = vrot.slane %v242, %v347
        %v349 = vmul.f32 %v344, %v302
        %v350 = vmul.f32 %v348, %v304
        %v351 = vsel %vm257, %v339, %v349
        %v352 = vsel %vm258, %v340, %v350
        %v353 = vlaneseq
        %v354 = vshrl.u32 %v353, 7
        %v355 = vsub.s32 6, %v354
        %v356 = vrot.slane %v239, %v355
        %v357 = vlaneseq
        %v358 = vshrl.u32 %v357, 7
        %v359 = vsub.s32 6, %v358
        %v360 = vrot.slane %v240, %v359
        %v361 = vlaneseq
        %v362 = vshrl.u32 %v361, 7
        %v363 = vsub.s32 2, %v362
        %v364 = vrot.slane %v241, %v363
        %v365 = vlaneseq
        %v366 = vshrl.u32 %v365, 7
        %v367 = vsub.s32 2, %v366
        %v368 = vrot.slane %v242, %v367
        %v369 = vsel %vm257, %v356, %v364
        %v370 = vsel %vm258, %v360, %v368
        %v371 = vsub.f32 %v302, %v288
        %v372 = vsub.f32 %v304, %v290
        %v373 = vmul.f32 %v369, %v371
        %v374 = vmul.f32 %v370, %v372
        %v375 = vadd.f32 %v351, %v373
        %v376 = vadd.f32 %v352, %v374
        %v377 = vlaneseq
        %v378 = vshrl.u32 %v377, 7
        %v379 = vsub.s32 7, %v378
        %v380 = vrot.slane %v239, %v379
        %v381 = vlaneseq
        %v382 = vshrl.u32 %v381, 7
        %v383 = vsub.s32 7, %v382
        %v384 = vrot.slane %v240, %v383
        %v385 = vlaneseq
        %v386 = vshrl.u32 %v385, 7
        %v387 = vsub.s32 3, %v386
        %v388 = vrot.slane %v241, %v387
        %v389 = vlaneseq
        %v390 = vshrl.u32 %v389, 7
        %v391 = vsub.s32 3, %v390
        %v392 = vrot.slane %v242, %v391
        %v393 = vsel %vm257, %v380, %v388
        %v394 = vsel %vm258, %v384, %v392
        %v395 = vmul.f32 %v273, %v302
        %v396 = vmul.f32 %v274, %v304
        %v397 = vmul.f32 %v393, %v395
        %v398 = vmul.f32 %v394, %v396
        %v399 = vadd.f32 %v375, %v397
        %v400 = vadd.f32 %v376, %v398
        %v401 = vlaneseq
        %v402 = vshrl.u32 %v401, 7
        %v403 = vsub.s32 4, %v402
        %v404 = vrot.slane %v241, %v403
        %v405 = vlaneseq
        %v406 = vshrl.u32 %v405, 7
        %v407 = vsub.s32 4, %v406
        %v408 = vrot.slane %v242, %v407
        %v409 = vmul.f32 %v327, %v404
        %v410 = vmul.f32 %v328, %v408
        %v411 = vmax.f32 %v409, 0.0
        %v412 = vmax.f32 %v410, 0.0
        %413 = vst [vmem:[%s228] sm:$0xff] %v411
        %414 = vst [vmem:[%s228 + $0x8] sm:$0xff] %v412
        %v415 = vmax.f32 %v399, 0.0
        %v416 = vmax.f32 %v400, 0.0
        %417 = vst [vmem:[%s235] sm:$0xff] %v415
        %418 = vst [vmem:[%s235 + $0x8] sm:$0xff] %v416
        %s419 = sand.u32 %s99, 1
        %s420 = scalar_lea.sflag [#allocation4], %s419
        %s421 = sand.u32 %s99, 1
        %s422 = smul.addr %s421, 16
        %s423 = scalar_lea.vmem [#allocation7], %s422
        %s424 = sand.u32 %s127, 1
        %s425 = scalar_lea.sflag [#allocation9], %s424
        %s426 = sand.u32 %s127, 1
        %s427 = smul.addr %s426, 16
        %s428 = scalar_lea.vmem [#allocation8], %s427
        // Predicated region
        $region37: #{tpu_custom_call.1} parent=27 // pred_check
          %p429 = pneg %p109
        $region38: #{tpu_custom_call.1} parent=27 // pred_check_branch
          %431 = sbr.rel (%p429) target = $region40
        $region39: #{tpu_custom_call.1} parent=27 // pred_region
          %s432 = smul.u32 2, %s30
          %s434 = ssub.s32 256, 256
          %435 = vsyncadd %s420, %s434
          %s436 = smul.addr %s29, 2
          %s437 = sadd.s32 %s432, %s436
          %s438 = smul.addr %s437, 128
          %s439 = scalar_lea.hbm %s2, %s438
          %s441 = sshll.u32 %s423, 4
          %s442 = int_to_ptr.vmem [resolvable:$true] %s441
          %444 = dma.vmem_to_hbm [thread:$0]  %s442, 256, %s439, %s420
        $region40: #{tpu_custom_call.1} parent=27 // pred_fallthru
          _
        // Predicated region
        $region41: #{tpu_custom_call.1} parent=27 // pred_check
          %p445 = pneg %p137
        $region42: #{tpu_custom_call.1} parent=27 // pred_check_branch
          %447 = sbr.rel (%p445) target = $region44
        $region43: #{tpu_custom_call.1} parent=27 // pred_region
          %s448 = smul.u32 2, %s30
          %s450 = ssub.s32 256, 256
          %451 = vsyncadd %s425, %s450
          %s452 = smul.addr %s29, 2
          %s453 = sadd.s32 %s448, %s452
          %s454 = smul.addr %s453, 128
          %s455 = scalar_lea.hbm %s3, %s454
          %s457 = sshll.u32 %s428, 4
          %s458 = int_to_ptr.vmem [resolvable:$true] %s457
          %460 = dma.vmem_to_hbm [thread:$0]  %s458, 256, %s455, %s425
        $region44: #{tpu_custom_call.1} parent=27 // pred_fallthru
          _
      $region28: #{tpu_custom_call.1} parent=5 // pred_fallthru
        _
      %p461 = scmp.le.s32.totalorder 2, %s20
      // Predicated region
      $region45: #{tpu_custom_call.1} parent=5 // pred_check
        %p462 = pneg %p461
      $region46: #{tpu_custom_call.1} parent=5 // pred_check_branch
        %464 = sbr.rel (%p462) target = $region48
      $region47: #{tpu_custom_call.1} parent=5 // pred_region
        %s465 = ssub.s32 %s20, 2
        // Predicated region
        $region49: #{tpu_custom_call.1} parent=47 // pred_check
          %p466 = pneg %p115
        $region50: #{tpu_custom_call.1} parent=47 // pred_check_branch
          %468 = sbr.rel (%p466) target = $region52
        $region51: #{tpu_custom_call.1} parent=47 // pred_region
          %s469 = sand.u32 %s100, 1
          %s470 = scalar_lea.sflag [#allocation4], %s469
          %s471 = sand.u32 %s100, 1
          %s472 = smul.addr %s471, 16
          %s473 = scalar_lea.vmem [#allocation7], %s472
          %474 = dma.done %s470, 256
        $region52: #{tpu_custom_call.1} parent=47 // pred_fallthru
          _
        // Predicated region
        $region53: #{tpu_custom_call.1} parent=47 // pred_check
          %p475 = pneg %p143
        $region54: #{tpu_custom_call.1} parent=47 // pred_check_branch
          %477 = sbr.rel (%p475) target = $region56
        $region55: #{tpu_custom_call.1} parent=47 // pred_region
          %s478 = sand.u32 %s128, 1
          %s479 = scalar_lea.sflag [#allocation9], %s478
          %s480 = sand.u32 %s128, 1
          %s481 = smul.addr %s480, 16
          %s482 = scalar_lea.vmem [#allocation8], %s481
          %483 = dma.done %s479, 256
        $region56: #{tpu_custom_call.1} parent=47 // pred_fallthru
          _
      $region48: #{tpu_custom_call.1} parent=5 // pred_fallthru
        _
    $region6: #{tpu_custom_call.1} parent=1 // loop_footer
      %s24 = sadd.s32 1, %s20
    $region7: #{tpu_custom_call.1} parent=1 // loop_footer_branch
      %19 = sbr.rel target = $region3
    $region8: #{tpu_custom_call.1} parent=1 // loop_exit
      _
    %484 = vsyncpa [#allocation3], 1
    %s485 = scalar_lea.sflag [#allocation3], 1
    %486 = vsyncpa %s485, 1
    %487 = vsyncpa [#allocation6], 1
    %488 = vsyncpa [#allocation4], 1
    %s489 = scalar_lea.sflag [#allocation4], 1
    %490 = vsyncpa %s489, 1
    %491 = vsyncpa [#allocation9], 1
    %s492 = scalar_lea.sflag [#allocation9], 1
    %493 = vsyncpa %s492, 1

</llo_original>
